<compile_context>
chip_gen: v7x
topology: tpu7x:2x2x1
jax: 0.10.0
libtpu: 0.0.40
codegen_flags: <defaults>
</compile_context>

<pallas_src>
import functools

import jax
import jax.numpy as jnp
from jax import lax
from jax.experimental import pallas as pl
from jax.experimental.pallas import tpu as pltpu

_LANES = 128
_TILE_ROWS = 512  # (512, 128) int8 tile = 64 KiB; multiple of the (32, 128) int8 min tile


def _keep_mask_kernel(seed_ref, mask_ref, *, threshold):
    """Writes the int8 keep-mask (1 = keep, 0 = drop) for one (TILE_ROWS, 128) tile."""
    tile_r, lanes = mask_ref.shape
    base = pl.program_id(0) * jnp.int32(tile_r * lanes)
    row = lax.broadcasted_iota(jnp.int32, (tile_r, lanes), 0)
    col = lax.broadcasted_iota(jnp.int32, (tile_r, lanes), 1)
    # Unique global counter per stored value (wrapping int32 arithmetic is fine).
    h = base + row * jnp.int32(lanes) + col
    # Mix in the seed, then murmur3 fmix32 (counter-based PRNG, pure VPU ops).
    h = h + seed_ref[0] * jnp.int32(-1640531527)            # 0x9E3779B9
    h = h ^ lax.shift_right_logical(h, jnp.int32(16))
    h = h * jnp.int32(-2048144789)                          # 0x85EBCA6B
    h = h ^ lax.shift_right_logical(h, jnp.int32(13))
    h = h * jnp.int32(-1028477387)                          # 0xC2B2AE35
    h = h ^ lax.shift_right_logical(h, jnp.int32(16))
    # h is uniform over all 2^32 int32 bit patterns; a signed integer compare
    # against a precomputed threshold gives keep-probability (1 - p) exactly,
    # replacing the u32->f32 convert + fmul + float compare of the old kernel.
    keep = h >= jnp.int32(threshold)
    mask_ref[...] = keep.astype(jnp.int8)


@functools.partial(jax.jit, static_argnames=("p", "nnz"))
def _sparse_dropout_device(indices, values, seed, *, p, nnz):
    """Runs the mask kernel + on-device compaction. Returns padded outputs + count."""
    rows = pl.cdiv(nnz, _LANES)
    n_tiles = max(1, pl.cdiv(rows, _TILE_ROWS))
    rows_padded = n_tiles * _TILE_ROWS

    # Signed threshold t such that P(h >= t) == 1 - p for h uniform over int32.
    t = int(round(float(p) * 4294967296.0)) - 2147483648
    t = max(-2147483648, min(t, 2147483647))  # p >= 1.0 -> keep prob ~2^-32

    seed_arr = jnp.reshape(seed.astype(jnp.int32), (1,))

    mask2d = pl.pallas_call(
        functools.partial(_keep_mask_kernel, threshold=t),
        out_shape=jax.ShapeDtypeStruct((rows_padded, _LANES), jnp.int8),
        grid=(n_tiles,),
        in_specs=[pl.BlockSpec(memory_space=pltpu.SMEM)],          # seed scalar
        out_specs=pl.BlockSpec((_TILE_ROWS, _LANES), lambda i: (i, 0)),
        compiler_params=pltpu.CompilerParams(
            dimension_semantics=("parallel",)),
    )(seed_arr)

    keep = mask2d.reshape(-1)[:nnz].astype(bool)
    n_keep = jnp.sum(keep.astype(jnp.int32))
    # Stable compaction (same order as torch.masked_select), padded to nnz.
    (kept_pos,) = jnp.nonzero(keep, size=nnz, fill_value=0)
    new_values_padded = jnp.take(values, kept_pos, axis=0)
    new_indices_padded = jnp.take(indices, kept_pos, axis=1)
    return new_indices_padded, new_values_padded, n_keep


def sparse_dropout(indices, values, dense_shape, p=0.5, training=True, seed=0):
    """Mimics sparse_dropout.forward on a COO (indices[2, nnz], values[nnz]) tensor.

    Returns (new_indices, new_values, dense_shape); values keep their dtype and
    are never rescaled (matching the reference module).
    """
    if (not training) or p <= 0.0:
        return indices, values, dense_shape

    nnz = int(values.shape[0])
    seed_arr = jnp.asarray(seed, dtype=jnp.int32)
    idx_padded, val_padded, n_keep = _sparse_dropout_device(
        indices, values, seed_arr, p=float(p), nnz=nnz)

    # TODO(synk): the output nnz is data-dependent; only this one scalar is read
    # back to host, then the device-resident padded arrays are statically sliced.
    n = int(n_keep)
    return idx_padded[:, :n], val_padded[:n], dense_shape


if __name__ == "__main__":
    key = jax.random.PRNGKey(0)
    k_idx, k_val = jax.random.split(key)

    dense_shape = (16, 16)
    nnz = 256
    indices = jax.random.randint(k_idx, (2, nnz), 0, 16, dtype=jnp.int32)
    values = jax.random.normal(k_val, (nnz,), dtype=jnp.float32)

    new_indices, new_values, out_shape = sparse_dropout(
        indices, values, dense_shape, p=0.5, training=True, seed=0
    )
    jax.block_until_ready((new_indices, new_values))

    # Shape / consistency checks.
    assert new_indices.shape[0] == 2
    assert new_indices.shape[1] == new_values.shape[0]
    n_kept = int(new_values.shape[0])
    assert 0 < n_kept < nnz
    # Keep-rate should be near 1 - p = 0.5 (loose bound, >8 sigma margin).
    assert 0.2 <= n_kept / nnz <= 0.8
    # Kept values are untouched copies of original values (no rescale, same dtype).
    assert new_values.dtype == values.dtype
    assert bool(jnp.all(jnp.isin(new_values, values)))
    assert out_shape == dense_shape

    # Eval / p<=0 path returns the input unchanged.
    same_i, same_v, _ = sparse_dropout(
        indices, values, dense_shape, p=0.5, training=False
    )
    assert same_v.shape[0] == nnz

    print("KERNEL_OK")
</pallas_src>

<mosaic_0001>
module attributes {stable_mosaic.version = 11 : i64} {
  func.func private @main(%arg0: i32) attributes {dimension_semantics = [#tpu.dimension_semantics<core_parallel>], iteration_bounds = array<i64: 2>, tpu.core_type = #tpu.core_type<sc_scalar_subcore>, window_params = []} {
    return
  }
}

module attributes {stable_mosaic.version = 11 : i64} {
  func.func private @main(%arg0: i32) attributes {dimension_semantics = [#tpu.dimension_semantics<core_parallel>], iteration_bounds = array<i64: 2>, tpu.core_type = #tpu.core_type<sc_scalar_subcore>, window_params = []} {
    return
  }
}

module attributes {stable_mosaic.version = 11 : i64} {
  func.func @_keep_mask_kernel(%arg0: i32, %arg1: memref<1xi32, #tpu.memory_space<smem>>, %arg2: memref<512x128xi8, #tpu.memory_space<vmem>>) attributes {dimension_semantics = [#tpu.dimension_semantics<parallel>], iteration_bounds = array<i64: 1>, scalar_prefetch = 0 : i64, scratch_operands = 0 : i64, tpu.core_type = #tpu.core_type<tc>, window_params = [{transform_indices = @transform_0, window_bounds = array<i64: 1>}, {transform_indices = @transform_1, window_bounds = array<i64: 512, 128>}]} {
    %c65536_i32 = arith.constant 65536 : i32
    %0 = arith.muli %arg0, %c65536_i32 : i32
    %1 = tpu.iota {dimensions = array<i32: 0>} : vector<512x128xi32>
    %2 = tpu.iota {dimensions = array<i32: 1>} : vector<512x128xi32>
    %c128_i32 = arith.constant 128 : i32
    %3 = vector.broadcast %c128_i32 : i32 to vector<512x128xi32>
    %4 = arith.muli %1, %3 : vector<512x128xi32>
    %5 = vector.broadcast %0 : i32 to vector<512x128xi32>
    %6 = arith.addi %5, %4 : vector<512x128xi32>
    %7 = arith.addi %6, %2 : vector<512x128xi32>
    %c0 = arith.constant 0 : index
    %8 = memref.load %arg1[%c0] : memref<1xi32, #tpu.memory_space<smem>>
    %c-1640531527_i32 = arith.constant -1640531527 : i32
    %9 = arith.muli %8, %c-1640531527_i32 : i32
    %10 = vector.broadcast %9 : i32 to vector<512x128xi32>
    %11 = arith.addi %7, %10 : vector<512x128xi32>
    %c16_i32 = arith.constant 16 : i32
    %12 = vector.broadcast %c16_i32 : i32 to vector<512x128xi32>
    %13 = arith.shrui %11, %12 : vector<512x128xi32>
    %14 = arith.xori %11, %13 : vector<512x128xi32>
    %c-2048144789_i32 = arith.constant -2048144789 : i32
    %15 = vector.broadcast %c-2048144789_i32 : i32 to vector<512x128xi32>
    %16 = arith.muli %14, %15 : vector<512x128xi32>
    %c13_i32 = arith.constant 13 : i32
    %17 = vector.broadcast %c13_i32 : i32 to vector<512x128xi32>
    %18 = arith.shrui %16, %17 : vector<512x128xi32>
    %19 = arith.xori %16, %18 : vector<512x128xi32>
    %c-1028477387_i32 = arith.constant -1028477387 : i32
    %20 = vector.broadcast %c-1028477387_i32 : i32 to vector<512x128xi32>
    %21 = arith.muli %19, %20 : vector<512x128xi32>
    %c16_i32_0 = arith.constant 16 : i32
    %22 = vector.broadcast %c16_i32_0 : i32 to vector<512x128xi32>
    %23 = arith.shrui %21, %22 : vector<512x128xi32>
    %24 = arith.xori %21, %23 : vector<512x128xi32>
    %c0_i32 = arith.constant 0 : i32
    %25 = vector.broadcast %c0_i32 : i32 to vector<512x128xi32>
    %26 = arith.cmpi sge, %24, %25 : vector<512x128xi32>
    %27 = arith.extui %26 : vector<512x128xi1> to vector<512x128xi8>
    %c0_1 = arith.constant 0 : index
    %c0_2 = arith.constant 0 : index
    %28 = vector.load %arg2[%c0_1, %c0_2] : memref<512x128xi8, #tpu.memory_space<vmem>>, vector<512x128xi8>
    tpu.vector_store %arg2[%c0_1, %c0_2], %27 {strides = array<i32>} : memref<512x128xi8, #tpu.memory_space<vmem>>, vector<512x128xi8>,
    return
  }
  func.func @transform_0(%arg0: i32) -> i32 {
    %c0_i32 = arith.constant 0 : i32
    %c0_i32_0 = arith.constant 0 : i32
    return %c0_i32 : i32
  }
  func.func @transform_1(%arg0: i32) -> (i32, i32) {
    %c0_i32 = arith.constant 0 : i32
    %c0_i32_0 = arith.constant 0 : i32
    return %arg0, %c0_i32 : i32, i32
  }
}

</mosaic_0001>

<llo_original>
// kernel: _sparse_dropout_device.1
$region0: #{_sparse_dropout_device.1}
  #allocation0 [shape = 'u32[]', space=smem, size = 0x4, offset = 0x4, fixed_abs, tag = 'smem constant byte address 0x4 - core index']
  #allocation1 [shape = 'u32[144,128]{1,0:T(1,128)}', space=vmem, size = 0x12000, scoped, tag = 'internal scratch']
  #allocation2 [shape = 's32[1]{0:T(128)S(6)}', space=smem, size = 0x200, scoped, tag = 'scoped memory for _sparse_dropout_device.1']
  %s0 = inlined_call_operand.<no memory space> [shape: s32[1], index: 0, kind: input, shape index: {}]
  %s1 = inlined_call_operand.vmem [shape: s8[512,128], index: 1, kind: output, shape index: {}]
  %s2 = sld [smem:[#allocation0]]
  $region14: #{_sparse_dropout_device.1} parent=0
    _
  %s4 = ssub.s32 1, %s2
  %s5 = scalar_select 0, %s4, %s2
  %6 = sst [smem:[#allocation2]] %s0
  // Predicated region
  $region2: #{_sparse_dropout_device.1} parent=0 // pred_check
    _
  $region3: #{_sparse_dropout_device.1} parent=0 // pred_check_branch
    %8 = sbr.rel (0) target = $region5
  $region4: #{_sparse_dropout_device.1} parent=0 // pred_region
    _
  $region5: #{_sparse_dropout_device.1} parent=0 // pred_fallthru
    _
  %s11 = smul.u32 0, 65536
  %v12 = vlaneseq
  %v13 = vshrl.u32 %v12, 7
  %v14 = vadd.s32 %v13, 8
  %v15 = vadd.s32 %v13, 16
  %v16 = vadd.s32 %v13, 24
  %v17 = vadd.s32 %v13, 32
  %v18 = vadd.s32 %v13, 40
  %v19 = vadd.s32 %v13, 48
  %v20 = vadd.s32 %v13, 56
  %v21 = vadd.s32 %v13, 64
  %v22 = vadd.s32 %v13, 72
  %v23 = vadd.s32 %v13, 80
  %v24 = vadd.s32 %v13, 88
  %v25 = vadd.s32 %v13, 96
  %v26 = vadd.s32 %v13, 104
  %v27 = vadd.s32 %v13, 112
  %v28 = vadd.s32 %v13, 120
  %v29 = vadd.s32 %v13, 128
  %v30 = vadd.s32 %v13, 136
  %v31 = vadd.s32 %v13, 144
  %v32 = vadd.s32 %v13, 152
  %v33 = vadd.s32 %v13, 160
  %v34 = vadd.s32 %v13, 168
  %v35 = vadd.s32 %v13, 176
  %v36 = vadd.s32 %v13, 184
  %v37 = vadd.s32 %v13, 192
  %v38 = vadd.s32 %v13, 200
  %v39 = vadd.s32 %v13, 208
  %v40 = vadd.s32 %v13, 216
  %v41 = vadd.s32 %v13, 224
  %v42 = vadd.s32 %v13, 232
  %v43 = vadd.s32 %v13, 240
  %v44 = vadd.s32 %v13, 248
  %v45 = vadd.s32 %v13, 256
  %v46 = vadd.s32 %v13, 264
  %v47 = vadd.s32 %v13, 272
  %v48 = vadd.s32 %v13, 280
  %v49 = vadd.s32 %v13, 288
  %v50 = vadd.s32 %v13, 296
  %v51 = vadd.s32 %v13, 304
  %v52 = vadd.s32 %v13, 312
  %v53 = vadd.s32 %v13, 320
  %v54 = vadd.s32 %v13, 328
  %v55 = vadd.s32 %v13, 336
  %v56 = vadd.s32 %v13, 344
  %v57 = vadd.s32 %v13, 352
  %v58 = vadd.s32 %v13, 360
  %v59 = vadd.s32 %v13, 368
  %v60 = vadd.s32 %v13, 376
  %v61 = vadd.s32 %v13, 384
  %v62 = vadd.s32 %v13, 392
  %v63 = vadd.s32 %v13, 400
  %v64 = vadd.s32 %v13, 408
  %v65 = vadd.s32 %v13, 416
  %v66 = vadd.s32 %v13, 424
  %v67 = vadd.s32 %v13, 432
  %v68 = vadd.s32 %v13, 440
  %v69 = vadd.s32 %v13, 448
  %v70 = vadd.s32 %v13, 456
  %v71 = vadd.s32 %v13, 464
  %v72 = vadd.s32 %v13, 472
  %v73 = vadd.s32 %v13, 480
  %v74 = vadd.s32 %v13, 488
  %v75 = vadd.s32 %v13, 496
  %v76 = vadd.s32 %v13, 504
  %v77 = vlaneseq
  %v78 = vand.u32 %v77, 127
  %v79 = vmul.u32 %v13, 128
  %v80 = vmul.u32 %v14, 128
  %v81 = vmul.u32 %v15, 128
  %v82 = vmul.u32 %v16, 128
  %v83 = vmul.u32 %v17, 128
  %v84 = vmul.u32 %v18, 128
  %v85 = vmul.u32 %v19, 128
  %v86 = vmul.u32 %v20, 128
  %v87 = vmul.u32 %v21, 128
  %v88 = vmul.u32 %v22, 128
  %v89 = vmul.u32 %v23, 128
  %v90 = vmul.u32 %v24, 128
  %v91 = vmul.u32 %v25, 128
  %v92 = vmul.u32 %v26, 128
  %v93 = vmul.u32 %v27, 128
  %v94 = vmul.u32 %v28, 128
  %v95 = vmul.u32 %v29, 128
  %v96 = vmul.u32 %v30, 128
  %v97 = vmul.u32 %v31, 128
  %v98 = vmul.u32 %v32, 128
  %v99 = vmul.u32 %v33, 128
  %v100 = vmul.u32 %v34, 128
  %v101 = vmul.u32 %v35, 128
  %v102 = vmul.u32 %v36, 128
  %v103 = vmul.u32 %v37, 128
  %v104 = vmul.u32 %v38, 128
  %v105 = vmul.u32 %v39, 128
  %v106 = vmul.u32 %v40, 128
  %v107 = vmul.u32 %v41, 128
  %v108 = vmul.u32 %v42, 128
  %v109 = vmul.u32 %v43, 128
  %v110 = vmul.u32 %v44, 128
  %v111 = vmul.u32 %v45, 128
  %v112 = vmul.u32 %v46, 128
  %v113 = vmul.u32 %v47, 128
  %v114 = vmul.u32 %v48, 128
  %v115 = vmul.u32 %v49, 128
  %v116 = vmul.u32 %v50, 128
  %v117 = vmul.u32 %v51, 128
  %v118 = vmul.u32 %v52, 128
  %v119 = vmul.u32 %v53, 128
  %v120 = vmul.u32 %v54, 128
  %v121 = vmul.u32 %v55, 128
  %v122 = vmul.u32 %v56, 128
  %v123 = vmul.u32 %v57, 128
  %v124 = vmul.u32 %v58, 128
  %v125 = vmul.u32 %v59, 128
  %v126 = vmul.u32 %v60, 128
  %v127 = vmul.u32 %v61, 128
  %v128 = vmul.u32 %v62, 128
  %v129 = vmul.u32 %v63, 128
  %v130 = vmul.u32 %v64, 128
  %v131 = vmul.u32 %v65, 128
  %v132 = vmul.u32 %v66, 128
  %v133 = vmul.u32 %v67, 128
  %v134 = vmul.u32 %v68, 128
  %v135 = vmul.u32 %v69, 128
  %v136 = vmul.u32 %v70, 128
  %v137 = vmul.u32 %v71, 128
  %v138 = vmul.u32 %v72, 128
  %v139 = vmul.u32 %v73, 128
  %v140 = vmul.u32 %v74, 128
  %v141 = vmul.u32 %v75, 128
  %v142 = vmul.u32 %v76, 128
  %v143 = vstv %s11
  %v144 = vadd.s32 %v143, %v79
  %v145 = vadd.s32 %v143, %v80
  %v146 = vadd.s32 %v143, %v81
  %v147 = vadd.s32 %v143, %v82
  %v148 = vadd.s32 %v143, %v83
  %v149 = vadd.s32 %v143, %v84
  %v150 = vadd.s32 %v143, %v85
  %v151 = vadd.s32 %v143, %v86
  %v152 = vadd.s32 %v143, %v87
  %v153 = vadd.s32 %v143, %v88
  %v154 = vadd.s32 %v143, %v89
  %v155 = vadd.s32 %v143, %v90
  %v156 = vadd.s32 %v143, %v91
  %v157 = vadd.s32 %v143, %v92
  %v158 = vadd.s32 %v143, %v93
  %v159 = vadd.s32 %v143, %v94
  %v160 = vadd.s32 %v143, %v95
  %v161 = vadd.s32 %v143, %v96
  %v162 = vadd.s32 %v143, %v97
  %v163 = vadd.s32 %v143, %v98
  %v164 = vadd.s32 %v143, %v99
  %v165 = vadd.s32 %v143, %v100
  %v166 = vadd.s32 %v143, %v101
  %v167 = vadd.s32 %v143, %v102
  %v168 = vadd.s32 %v143, %v103
  %v169 = vadd.s32 %v143, %v104
  %v170 = vadd.s32 %v143, %v105
  %v171 = vadd.s32 %v143, %v106
  %v172 = vadd.s32 %v143, %v107
  %v173 = vadd.s32 %v143, %v108
  %v174 = vadd.s32 %v143, %v109
  %v175 = vadd.s32 %v143, %v110
  %v176 = vadd.s32 %v143, %v111
  %v177 = vadd.s32 %v143, %v112
  %v178 = vadd.s32 %v143, %v113
  %v179 = vadd.s32 %v143, %v114
  %v180 = vadd.s32 %v143, %v115
  %v181 = vadd.s32 %v143, %v116
  %v182 = vadd.s32 %v143, %v117
  %v183 = vadd.s32 %v143, %v118
  %v184 = vadd.s32 %v143, %v119
  %v185 = vadd.s32 %v143, %v120
  %v186 = vadd.s32 %v143, %v121
  %v187 = vadd.s32 %v143, %v122
  %v188 = vadd.s32 %v143, %v123
  %v189 = vadd.s32 %v143, %v124
  %v190 = vadd.s32 %v143, %v125
  %v191 = vadd.s32 %v143, %v126
  %v192 = vadd.s32 %v143, %v127
  %v193 = vadd.s32 %v143, %v128
  %v194 = vadd.s32 %v143, %v129
  %v195 = vadd.s32 %v143, %v130
  %v196 = vadd.s32 %v143, %v131
  %v197 = vadd.s32 %v143, %v132
  %v198 = vadd.s32 %v143, %v133
  %v199 = vadd.s32 %v143, %v134
  %v200 = vadd.s32 %v143, %v135
  %v201 = vadd.s32 %v143, %v136
  %v202 = vadd.s32 %v143, %v137
  %v203 = vadd.s32 %v143, %v138
  %v204 = vadd.s32 %v143, %v139
  %v205 = vadd.s32 %v143, %v140
  %v206 = vadd.s32 %v143, %v141
  %v207 = vadd.s32 %v143, %v142
  %v208 = vadd.s32 %v144, %v78
  %v209 = vadd.s32 %v145, %v78
  %v210 = vadd.s32 %v146, %v78
  %v211 = vadd.s32 %v147, %v78
  %v212 = vadd.s32 %v148, %v78
  %v213 = vadd.s32 %v149, %v78
  %v214 = vadd.s32 %v150, %v78
  %v215 = vadd.s32 %v151, %v78
  %v216 = vadd.s32 %v152, %v78
  %v217 = vadd.s32 %v153, %v78
  %v218 = vadd.s32 %v154, %v78
  %v219 = vadd.s32 %v155, %v78
  %v220 = vadd.s32 %v156, %v78
  %v221 = vadd.s32 %v157, %v78
  %v222 = vadd.s32 %v158, %v78
  %v223 = vadd.s32 %v159, %v78
  %v224 = vadd.s32 %v160, %v78
  %v225 = vadd.s32 %v161, %v78
  %v226 = vadd.s32 %v162, %v78
  %v227 = vadd.s32 %v163, %v78
  %v228 = vadd.s32 %v164, %v78
  %v229 = vadd.s32 %v165, %v78
  %v230 = vadd.s32 %v166, %v78
  %v231 = vadd.s32 %v167, %v78
  %v232 = vadd.s32 %v168, %v78
  %v233 = vadd.s32 %v169, %v78
  %v234 = vadd.s32 %v170, %v78
  %v235 = vadd.s32 %v171, %v78
  %v236 = vadd.s32 %v172, %v78
  %v237 = vadd.s32 %v173, %v78
  %v238 = vadd.s32 %v174, %v78
  %v239 = vadd.s32 %v175, %v78
  %v240 = vadd.s32 %v176, %v78
  %v241 = vadd.s32 %v177, %v78
  %v242 = vadd.s32 %v178, %v78
  %v243 = vadd.s32 %v179, %v78
  %v244 = vadd.s32 %v180, %v78
  %v245 = vadd.s32 %v181, %v78
  %v246 = vadd.s32 %v182, %v78
  %v247 = vadd.s32 %v183, %v78
  %v248 = vadd.s32 %v184, %v78
  %v249 = vadd.s32 %v185, %v78
  %v250 = vadd.s32 %v186, %v78
  %v251 = vadd.s32 %v187, %v78
  %v252 = vadd.s32 %v188, %v78
  %v253 = vadd.s32 %v189, %v78
  %v254 = vadd.s32 %v190, %v78
  %v255 = vadd.s32 %v191, %v78
  %v256 = vadd.s32 %v192, %v78
  %v257 = vadd.s32 %v193, %v78
  %v258 = vadd.s32 %v194, %v78
  %v259 = vadd.s32 %v195, %v78
  %v260 = vadd.s32 %v196, %v78
  %v261 = vadd.s32 %v197, %v78
  %v262 = vadd.s32 %v198, %v78
  %v263 = vadd.s32 %v199, %v78
  %v264 = vadd.s32 %v200, %v78
  %v265 = vadd.s32 %v201, %v78
  %v266 = vadd.s32 %v202, %v78
  %v267 = vadd.s32 %v203, %v78
  %v268 = vadd.s32 %v204, %v78
  %v269 = vadd.s32 %v205, %v78
  %v270 = vadd.s32 %v206, %v78
  %v271 = vadd.s32 %v207, %v78
  %s272 = sld [smem:[#allocation2]]
  %s273 = smul.u32 %s272, 2654435769
  %v274 = vstv %s273
  %v275 = vadd.s32 %v208, %v274
  %v276 = vadd.s32 %v209, %v274
  %v277 = vadd.s32 %v210, %v274
  %v278 = vadd.s32 %v211, %v274
  %v279 = vadd.s32 %v212, %v274
  %v280 = vadd.s32 %v213, %v274
  %v281 = vadd.s32 %v214, %v274
  %v282 = vadd.s32 %v215, %v274
  %v283 = vadd.s32 %v216, %v274
  %v284 = vadd.s32 %v217, %v274
  %v285 = vadd.s32 %v218, %v274
  %v286 = vadd.s32 %v219, %v274
  %v287 = vadd.s32 %v220, %v274
  %v288 = vadd.s32 %v221, %v274
  %v289 = vadd.s32 %v222, %v274
  %v290 = vadd.s32 %v223, %v274
  %v291 = vadd.s32 %v224, %v274
  %v292 = vadd.s32 %v225, %v274
  %v293 = vadd.s32 %v226, %v274
  %v294 = vadd.s32 %v227, %v274
  %v295 = vadd.s32 %v228, %v274
  %v296 = vadd.s32 %v229, %v274
  %v297 = vadd.s32 %v230, %v274
  %v298 = vadd.s32 %v231, %v274
  %v299 = vadd.s32 %v232, %v274
  %v300 = vadd.s32 %v233, %v274
  %v301 = vadd.s32 %v234, %v274
  %v302 = vadd.s32 %v235, %v274
  %v303 = vadd.s32 %v236, %v274
  %v304 = vadd.s32 %v237, %v274
  %v305 = vadd.s32 %v238, %v274
  %v306 = vadd.s32 %v239, %v274
  %v307 = vadd.s32 %v240, %v274
  %v308 = vadd.s32 %v241, %v274
  %v309 = vadd.s32 %v242, %v274
  %v310 = vadd.s32 %v243, %v274
  %v311 = vadd.s32 %v244, %v274
  %v312 = vadd.s32 %v245, %v274
  %v313 = vadd.s32 %v246, %v274
  %v314 = vadd.s32 %v247, %v274
  %v315 = vadd.s32 %v248, %v274
  %v316 = vadd.s32 %v249, %v274
  %v317 = vadd.s32 %v250, %v274
  %v318 = vadd.s32 %v251, %v274
  %v319 = vadd.s32 %v252, %v274
  %v320 = vadd.s32 %v253, %v274
  %v321 = vadd.s32 %v254, %v274
  %v322 = vadd.s32 %v255, %v274
  %v323 = vadd.s32 %v256, %v274
  %v324 = vadd.s32 %v257, %v274
  %v325 = vadd.s32 %v258, %v274
  %v326 = vadd.s32 %v259, %v274
  %v327 = vadd.s32 %v260, %v274
  %v328 = vadd.s32 %v261, %v274
  %v329 = vadd.s32 %v262, %v274
  %v330 = vadd.s32 %v263, %v274
  %v331 = vadd.s32 %v264, %v274
  %v332 = vadd.s32 %v265, %v274
  %v333 = vadd.s32 %v266, %v274
  %v334 = vadd.s32 %v267, %v274
  %v335 = vadd.s32 %v268, %v274
  %v336 = vadd.s32 %v269, %v274
  %v337 = vadd.s32 %v270, %v274
  %v338 = vadd.s32 %v271, %v274
  %v339 = vshrl.u32 %v275, 16
  %v340 = vshrl.u32 %v276, 16
  %v341 = vshrl.u32 %v277, 16
  %v342 = vshrl.u32 %v278, 16
  %v343 = vshrl.u32 %v279, 16
  %v344 = vshrl.u32 %v280, 16
  %v345 = vshrl.u32 %v281, 16
  %v346 = vshrl.u32 %v282, 16
  %v347 = vshrl.u32 %v283, 16
  %v348 = vshrl.u32 %v284, 16
  %v349 = vshrl.u32 %v285, 16
  %v350 = vshrl.u32 %v286, 16
  %v351 = vshrl.u32 %v287, 16
  %v352 = vshrl.u32 %v288, 16
  %v353 = vshrl.u32 %v289, 16
  %v354 = vshrl.u32 %v290, 16
  %v355 = vshrl.u32 %v291, 16
  %v356 = vshrl.u32 %v292, 16
  %v357 = vshrl.u32 %v293, 16
  %v358 = vshrl.u32 %v294, 16
  %v359 = vshrl.u32 %v295, 16
  %v360 = vshrl.u32 %v296, 16
  %v361 = vshrl.u32 %v297, 16
  %v362 = vshrl.u32 %v298, 16
  %v363 = vshrl.u32 %v299, 16
  %v364 = vshrl.u32 %v300, 16
  %v365 = vshrl.u32 %v301, 16
  %v366 = vshrl.u32 %v302, 16
  %v367 = vshrl.u32 %v303, 16
  %v368 = vshrl.u32 %v304, 16
  %v369 = vshrl.u32 %v305, 16
  %v370 = vshrl.u32 %v306, 16
  %v371 = vshrl.u32 %v307, 16
  %v372 = vshrl.u32 %v308, 16
  %v373 = vshrl.u32 %v309, 16
  %v374 = vshrl.u32 %v310, 16
  %v375 = vshrl.u32 %v311, 16
  %v376 = vshrl.u32 %v312, 16
  %v377 = vshrl.u32 %v313, 16
  %v378 = vshrl.u32 %v314, 16
  %v379 = vshrl.u32 %v315, 16
  %v380 = vshrl.u32 %v316, 16
  %v381 = vshrl.u32 %v317, 16
  %v382 = vshrl.u32 %v318, 16
  %v383 = vshrl.u32 %v319, 16
  %v384 = vshrl.u32 %v320, 16
  %v385 = vshrl.u32 %v321, 16
  %v386 = vshrl.u32 %v322, 16
  %v387 = vshrl.u32 %v323, 16
  %v388 = vshrl.u32 %v324, 16
  %v389 = vshrl.u32 %v325, 16
  %v390 = vshrl.u32 %v326, 16
  %v391 = vshrl.u32 %v327, 16
  %v392 = vshrl.u32 %v328, 16
  %v393 = vshrl.u32 %v329, 16
  %v394 = vshrl.u32 %v330, 16
  %v395 = vshrl.u32 %v331, 16
  %v396 = vshrl.u32 %v332, 16
  %v397 = vshrl.u32 %v333, 16
  %v398 = vshrl.u32 %v334, 16
  %v399 = vshrl.u32 %v335, 16
  %v400 = vshrl.u32 %v336, 16
  %v401 = vshrl.u32 %v337, 16
  %v402 = vshrl.u32 %v338, 16
  %v403 = vxor.u32 %v275, %v339
  %v404 = vxor.u32 %v276, %v340
  %v405 = vxor.u32 %v277, %v341
  %v406 = vxor.u32 %v278, %v342
  %v407 = vxor.u32 %v279, %v343
  %v408 = vxor.u32 %v280, %v344
  %v409 = vxor.u32 %v281, %v345
  %v410 = vxor.u32 %v282, %v346
  %v411 = vxor.u32 %v283, %v347
  %v412 = vxor.u32 %v284, %v348
  %v413 = vxor.u32 %v285, %v349
  %v414 = vxor.u32 %v286, %v350
  %v415 = vxor.u32 %v287, %v351
  %v416 = vxor.u32 %v288, %v352
  %v417 = vxor.u32 %v289, %v353
  %v418 = vxor.u32 %v290, %v354
  %v419 = vxor.u32 %v291, %v355
  %v420 = vxor.u32 %v292, %v356
  %v421 = vxor.u32 %v293, %v357
  %v422 = vxor.u32 %v294, %v358
  %v423 = vxor.u32 %v295, %v359
  %v424 = vxor.u32 %v296, %v360
  %v425 = vxor.u32 %v297, %v361
  %v426 = vxor.u32 %v298, %v362
  %v427 = vxor.u32 %v299, %v363
  %v428 = vxor.u32 %v300, %v364
  %v429 = vxor.u32 %v301, %v365
  %v430 = vxor.u32 %v302, %v366
  %v431 = vxor.u32 %v303, %v367
  %v432 = vxor.u32 %v304, %v368
  %v433 = vxor.u32 %v305, %v369
  %v434 = vxor.u32 %v306, %v370
  %v435 = vxor.u32 %v307, %v371
  %v436 = vxor.u32 %v308, %v372
  %v437 = vxor.u32 %v309, %v373
  %v438 = vxor.u32 %v310, %v374
  %v439 = vxor.u32 %v311, %v375
  %v440 = vxor.u32 %v312, %v376
  %v441 = vxor.u32 %v313, %v377
  %v442 = vxor.u32 %v314, %v378
  %v443 = vxor.u32 %v315, %v379
  %v444 = vxor.u32 %v316, %v380
  %v445 = vxor.u32 %v317, %v381
  %v446 = vxor.u32 %v318, %v382
  %v447 = vxor.u32 %v319, %v383
  %v448 = vxor.u32 %v320, %v384
  %v449 = vxor.u32 %v321, %v385
  %v450 = vxor.u32 %v322, %v386
  %v451 = vxor.u32 %v323, %v387
  %v452 = vxor.u32 %v324, %v388
  %v453 = vxor.u32 %v325, %v389
  %v454 = vxor.u32 %v326, %v390
  %v455 = vxor.u32 %v327, %v391
  %v456 = vxor.u32 %v328, %v392
  %v457 = vxor.u32 %v329, %v393
  %v458 = vxor.u32 %v330, %v394
  %v459 = vxor.u32 %v331, %v395
  %v460 = vxor.u32 %v332, %v396
  %v461 = vxor.u32 %v333, %v397
  %v462 = vxor.u32 %v334, %v398
  %v463 = vxor.u32 %v335, %v399
  %v464 = vxor.u32 %v336, %v400
  %v465 = vxor.u32 %v337, %v401
  %v466 = vxor.u32 %v338, %v402
  %v467 = vmul.u32 %v403, 2246822507
  %v468 = vmul.u32 %v404, 2246822507
  %v469 = vmul.u32 %v405, 2246822507
  %v470 = vmul.u32 %v406, 2246822507
  %v471 = vmul.u32 %v407, 2246822507
  %v472 = vmul.u32 %v408, 2246822507
  %v473 = vmul.u32 %v409, 2246822507
  %v474 = vmul.u32 %v410, 2246822507
  %v475 = vmul.u32 %v411, 2246822507
  %v476 = vmul.u32 %v412, 2246822507
  %v477 = vmul.u32 %v413, 2246822507
  %v478 = vmul.u32 %v414, 2246822507
  %v479 = vmul.u32 %v415, 2246822507
  %v480 = vmul.u32 %v416, 2246822507
  %v481 = vmul.u32 %v417, 2246822507
  %v482 = vmul.u32 %v418, 2246822507
  %v483 = vmul.u32 %v419, 2246822507
  %v484 = vmul.u32 %v420, 2246822507
  %v485 = vmul.u32 %v421, 2246822507
  %v486 = vmul.u32 %v422, 2246822507
  %v487 = vmul.u32 %v423, 2246822507
  %v488 = vmul.u32 %v424, 2246822507
  %v489 = vmul.u32 %v425, 2246822507
  %v490 = vmul.u32 %v426, 2246822507
  %v491 = vmul.u32 %v427, 2246822507
  %v492 = vmul.u32 %v428, 2246822507
  %v493 = vmul.u32 %v429, 2246822507
  %v494 = vmul.u32 %v430, 2246822507
  %v495 = vmul.u32 %v431, 2246822507
  %v496 = vmul.u32 %v432, 2246822507
  %v497 = vmul.u32 %v433, 2246822507
  %v498 = vmul.u32 %v434, 2246822507
  %v499 = vmul.u32 %v435, 2246822507
  %v500 = vmul.u32 %v436, 2246822507
  %v501 = vmul.u32 %v437, 2246822507
  %v502 = vmul.u32 %v438, 2246822507
  %v503 = vmul.u32 %v439, 2246822507
  %v504 = vmul.u32 %v440, 2246822507
  %v505 = vmul.u32 %v441, 2246822507
  %v506 = vmul.u32 %v442, 2246822507
  %v507 = vmul.u32 %v443, 2246822507
  %v508 = vmul.u32 %v444, 2246822507
  %v509 = vmul.u32 %v445, 2246822507
  %v510 = vmul.u32 %v446, 2246822507
  %v511 = vmul.u32 %v447, 2246822507
  %v512 = vmul.u32 %v448, 2246822507
  %v513 = vmul.u32 %v449, 2246822507
  %v514 = vmul.u32 %v450, 2246822507
  %v515 = vmul.u32 %v451, 2246822507
  %v516 = vmul.u32 %v452, 2246822507
  %v517 = vmul.u32 %v453, 2246822507
  %v518 = vmul.u32 %v454, 2246822507
  %v519 = vmul.u32 %v455, 2246822507
  %v520 = vmul.u32 %v456, 2246822507
  %v521 = vmul.u32 %v457, 2246822507
  %v522 = vmul.u32 %v458, 2246822507
  %v523 = vmul.u32 %v459, 2246822507
  %v524 = vmul.u32 %v460, 2246822507
  %v525 = vmul.u32 %v461, 2246822507
  %v526 = vmul.u32 %v462, 2246822507
  %v527 = vmul.u32 %v463, 2246822507
  %v528 = vmul.u32 %v464, 2246822507
  %v529 = vmul.u32 %v465, 2246822507
  %v530 = vmul.u32 %v466, 2246822507
  %v531 = vshrl.u32 %v467, 13
  %v532 = vshrl.u32 %v468, 13
  %v533 = vshrl.u32 %v469, 13
  %v534 = vshrl.u32 %v470, 13
  %v535 = vshrl.u32 %v471, 13
  %v536 = vshrl.u32 %v472, 13
  %v537 = vshrl.u32 %v473, 13
  %v538 = vshrl.u32 %v474, 13
  %v539 = vshrl.u32 %v475, 13
  %v540 = vshrl.u32 %v476, 13
  %v541 = vshrl.u32 %v477, 13
  %v542 = vshrl.u32 %v478, 13
  %v543 = vshrl.u32 %v479, 13
  %v544 = vshrl.u32 %v480, 13
  %v545 = vshrl.u32 %v481, 13
  %v546 = vshrl.u32 %v482, 13
  %v547 = vshrl.u32 %v483, 13
  %v548 = vshrl.u32 %v484, 13
  %v549 = vshrl.u32 %v485, 13
  %v550 = vshrl.u32 %v486, 13
  %v551 = vshrl.u32 %v487, 13
  %v552 = vshrl.u32 %v488, 13
  %v553 = vshrl.u32 %v489, 13
  %v554 = vshrl.u32 %v490, 13
  %v555 = vshrl.u32 %v491, 13
  %v556 = vshrl.u32 %v492, 13
  %v557 = vshrl.u32 %v493, 13
  %v558 = vshrl.u32 %v494, 13
  %v559 = vshrl.u32 %v495, 13
  %v560 = vshrl.u32 %v496, 13
  %v561 = vshrl.u32 %v497, 13
  %v562 = vshrl.u32 %v498, 13
  %v563 = vshrl.u32 %v499, 13
  %v564 = vshrl.u32 %v500, 13
  %v565 = vshrl.u32 %v501, 13
  %v566 = vshrl.u32 %v502, 13
  %v567 = vshrl.u32 %v503, 13
  %v568 = vshrl.u32 %v504, 13
  %v569 = vshrl.u32 %v505, 13
  %v570 = vshrl.u32 %v506, 13
  %v571 = vshrl.u32 %v507, 13
  %v572 = vshrl.u32 %v508, 13
  %v573 = vshrl.u32 %v509, 13
  %v574 = vshrl.u32 %v510, 13
  %v575 = vshrl.u32 %v511, 13
  %v576 = vshrl.u32 %v512, 13
  %v577 = vshrl.u32 %v513, 13
  %v578 = vshrl.u32 %v514, 13
  %v579 = vshrl.u32 %v515, 13
  %v580 = vshrl.u32 %v516, 13
  %v581 = vshrl.u32 %v517, 13
  %v582 = vshrl.u32 %v518, 13
  %v583 = vshrl.u32 %v519, 13
  %v584 = vshrl.u32 %v520, 13
  %v585 = vshrl.u32 %v521, 13
  %v586 = vshrl.u32 %v522, 13
  %v587 = vshrl.u32 %v523, 13
  %v588 = vshrl.u32 %v524, 13
  %v589 = vshrl.u32 %v525, 13
  %v590 = vshrl.u32 %v526, 13
  %v591 = vshrl.u32 %v527, 13
  %v592 = vshrl.u32 %v528, 13
  %v593 = vshrl.u32 %v529, 13
  %v594 = vshrl.u32 %v530, 13
  %v595 = vxor.u32 %v467, %v531
  %v596 = vxor.u32 %v468, %v532
  %v597 = vxor.u32 %v469, %v533
  %v598 = vxor.u32 %v470, %v534
  %v599 = vxor.u32 %v471, %v535
  %v600 = vxor.u32 %v472, %v536
  %v601 = vxor.u32 %v473, %v537
  %v602 = vxor.u32 %v474, %v538
  %v603 = vxor.u32 %v475, %v539
  %v604 = vxor.u32 %v476, %v540
  %v605 = vxor.u32 %v477, %v541
  %v606 = vxor.u32 %v478, %v542
  %v607 = vxor.u32 %v479, %v543
  %v608 = vxor.u32 %v480, %v544
  %v609 = vxor.u32 %v481, %v545
  %v610 = vxor.u32 %v482, %v546
  %v611 = vxor.u32 %v483, %v547
  %v612 = vxor.u32 %v484, %v548
  %v613 = vxor.u32 %v485, %v549
  %v614 = vxor.u32 %v486, %v550
  %v615 = vxor.u32 %v487, %v551
  %v616 = vxor.u32 %v488, %v552
  %v617 = vxor.u32 %v489, %v553
  %v618 = vxor.u32 %v490, %v554
  %v619 = vxor.u32 %v491, %v555
  %v620 = vxor.u32 %v492, %v556
  %v621 = vxor.u32 %v493, %v557
  %v622 = vxor.u32 %v494, %v558
  %v623 = vxor.u32 %v495, %v559
  %v624 = vxor.u32 %v496, %v560
  %v625 = vxor.u32 %v497, %v561
  %v626 = vxor.u32 %v498, %v562
  %v627 = vxor.u32 %v499, %v563
  %v628 = vxor.u32 %v500, %v564
  %v629 = vxor.u32 %v501, %v565
  %v630 = vxor.u32 %v502, %v566
  %v631 = vxor.u32 %v503, %v567
  %v632 = vxor.u32 %v504, %v568
  %v633 = vxor.u32 %v505, %v569
  %v634 = vxor.u32 %v506, %v570
  %v635 = vxor.u32 %v507, %v571
  %v636 = vxor.u32 %v508, %v572
  %v637 = vxor.u32 %v509, %v573
  %v638 = vxor.u32 %v510, %v574
  %v639 = vxor.u32 %v511, %v575
  %v640 = vxor.u32 %v512, %v576
  %v641 = vxor.u32 %v513, %v577
  %v642 = vxor.u32 %v514, %v578
  %v643 = vxor.u32 %v515, %v579
  %v644 = vxor.u32 %v516, %v580
  %v645 = vxor.u32 %v517, %v581
  %v646 = vxor.u32 %v518, %v582
  %v647 = vxor.u32 %v519, %v583
  %v648 = vxor.u32 %v520, %v584
  %v649 = vxor.u32 %v521, %v585
  %v650 = vxor.u32 %v522, %v586
  %v651 = vxor.u32 %v523, %v587
  %v652 = vxor.u32 %v524, %v588
  %v653 = vxor.u32 %v525, %v589
  %v654 = vxor.u32 %v526, %v590
  %v655 = vxor.u32 %v527, %v591
  %v656 = vxor.u32 %v528, %v592
  %v657 = vxor.u32 %v529, %v593
  %v658 = vxor.u32 %v530, %v594
  %v659 = vmul.u32 %v595, 3266489909
  %v660 = vmul.u32 %v596, 3266489909
  %v661 = vmul.u32 %v597, 3266489909
  %v662 = vmul.u32 %v598, 3266489909
  %v663 = vmul.u32 %v599, 3266489909
  %v664 = vmul.u32 %v600, 3266489909
  %v665 = vmul.u32 %v601, 3266489909
  %v666 = vmul.u32 %v602, 3266489909
  %v667 = vmul.u32 %v603, 3266489909
  %v668 = vmul.u32 %v604, 3266489909
  %v669 = vmul.u32 %v605, 3266489909
  %v670 = vmul.u32 %v606, 3266489909
  %v671 = vmul.u32 %v607, 3266489909
  %v672 = vmul.u32 %v608, 3266489909
  %v673 = vmul.u32 %v609, 3266489909
  %v674 = vmul.u32 %v610, 3266489909
  %v675 = vmul.u32 %v611, 3266489909
  %v676 = vmul.u32 %v612, 3266489909
  %v677 = vmul.u32 %v613, 3266489909
  %v678 = vmul.u32 %v614, 3266489909
  %v679 = vmul.u32 %v615, 3266489909
  %v680 = vmul.u32 %v616, 3266489909
  %v681 = vmul.u32 %v617, 3266489909
  %v682 = vmul.u32 %v618, 3266489909
  %v683 = vmul.u32 %v619, 3266489909
  %v684 = vmul.u32 %v620, 3266489909
  %v685 = vmul.u32 %v621, 3266489909
  %v686 = vmul.u32 %v622, 3266489909
  %v687 = vmul.u32 %v623, 3266489909
  %v688 = vmul.u32 %v624, 3266489909
  %v689 = vmul.u32 %v625, 3266489909
  %v690 = vmul.u32 %v626, 3266489909
  %v691 = vmul.u32 %v627, 3266489909
  %v692 = vmul.u32 %v628, 3266489909
  %v693 = vmul.u32 %v629, 3266489909
  %v694 = vmul.u32 %v630, 3266489909
  %v695 = vmul.u32 %v631, 3266489909
  %v696 = vmul.u32 %v632, 3266489909
  %v697 = vmul.u32 %v633, 3266489909
  %v698 = vmul.u32 %v634, 3266489909
  %v699 = vmul.u32 %v635, 3266489909
  %v700 = vmul.u32 %v636, 3266489909
  %v701 = vmul.u32 %v637, 3266489909
  %v702 = vmul.u32 %v638, 3266489909
  %v703 = vmul.u32 %v639, 3266489909
  %v704 = vmul.u32 %v640, 3266489909
  %v705 = vmul.u32 %v641, 3266489909
  %v706 = vmul.u32 %v642, 3266489909
  %v707 = vmul.u32 %v643, 3266489909
  %v708 = vmul.u32 %v644, 3266489909
  %v709 = vmul.u32 %v645, 3266489909
  %v710 = vmul.u32 %v646, 3266489909
  %v711 = vmul.u32 %v647, 3266489909
  %v712 = vmul.u32 %v648, 3266489909
  %v713 = vmul.u32 %v649, 3266489909
  %v714 = vmul.u32 %v650, 3266489909
  %v715 = vmul.u32 %v651, 3266489909
  %v716 = vmul.u32 %v652, 3266489909
  %v717 = vmul.u32 %v653, 3266489909
  %v718 = vmul.u32 %v654, 3266489909
  %v719 = vmul.u32 %v655, 3266489909
  %v720 = vmul.u32 %v656, 3266489909
  %v721 = vmul.u32 %v657, 3266489909
  %v722 = vmul.u32 %v658, 3266489909
  %v723 = vshrl.u32 %v659, 16
  %v724 = vshrl.u32 %v660, 16
  %v725 = vshrl.u32 %v661, 16
  %v726 = vshrl.u32 %v662, 16
  %v727 = vshrl.u32 %v663, 16
  %v728 = vshrl.u32 %v664, 16
  %v729 = vshrl.u32 %v665, 16
  %v730 = vshrl.u32 %v666, 16
  %v731 = vshrl.u32 %v667, 16
  %v732 = vshrl.u32 %v668, 16
  %v733 = vshrl.u32 %v669, 16
  %v734 = vshrl.u32 %v670, 16
  %v735 = vshrl.u32 %v671, 16
  %v736 = vshrl.u32 %v672, 16
  %v737 = vshrl.u32 %v673, 16
  %v738 = vshrl.u32 %v674, 16
  %v739 = vshrl.u32 %v675, 16
  %v740 = vshrl.u32 %v676, 16
  %v741 = vshrl.u32 %v677, 16
  %v742 = vshrl.u32 %v678, 16
  %v743 = vshrl.u32 %v679, 16
  %v744 = vshrl.u32 %v680, 16
  %v745 = vshrl.u32 %v681, 16
  %v746 = vshrl.u32 %v682, 16
  %v747 = vshrl.u32 %v683, 16
  %v748 = vshrl.u32 %v684, 16
  %v749 = vshrl.u32 %v685, 16
  %v750 = vshrl.u32 %v686, 16
  %v751 = vshrl.u32 %v687, 16
  %v752 = vshrl.u32 %v688, 16
  %v753 = vshrl.u32 %v689, 16
  %v754 = vshrl.u32 %v690, 16
  %v755 = vshrl.u32 %v691, 16
  %v756 = vshrl.u32 %v692, 16
  %v757 = vshrl.u32 %v693, 16
  %v758 = vshrl.u32 %v694, 16
  %v759 = vshrl.u32 %v695, 16
  %v760 = vshrl.u32 %v696, 16
  %v761 = vshrl.u32 %v697, 16
  %v762 = vshrl.u32 %v698, 16
  %v763 = vshrl.u32 %v699, 16
  %v764 = vshrl.u32 %v700, 16
  %v765 = vshrl.u32 %v701, 16
  %v766 = vshrl.u32 %v702, 16
  %v767 = vshrl.u32 %v703, 16
  %v768 = vshrl.u32 %v704, 16
  %v769 = vshrl.u32 %v705, 16
  %v770 = vshrl.u32 %v706, 16
  %v771 = vshrl.u32 %v707, 16
  %v772 = vshrl.u32 %v708, 16
  %v773 = vshrl.u32 %v709, 16
  %v774 = vshrl.u32 %v710, 16
  %v775 = vshrl.u32 %v711, 16
  %v776 = vshrl.u32 %v712, 16
  %v777 = vshrl.u32 %v713, 16
  %v778 = vshrl.u32 %v714, 16
  %v779 = vshrl.u32 %v715, 16
  %v780 = vshrl.u32 %v716, 16
  %v781 = vshrl.u32 %v717, 16
  %v782 = vshrl.u32 %v718, 16
  %v783 = vshrl.u32 %v719, 16
  %v784 = vshrl.u32 %v720, 16
  %v785 = vshrl.u32 %v721, 16
  %v786 = vshrl.u32 %v722, 16
  %v787 = vxor.u32 %v659, %v723
  %v788 = vxor.u32 %v660, %v724
  %v789 = vxor.u32 %v661, %v725
  %v790 = vxor.u32 %v662, %v726
  %v791 = vxor.u32 %v663, %v727
  %v792 = vxor.u32 %v664, %v728
  %v793 = vxor.u32 %v665, %v729
  %v794 = vxor.u32 %v666, %v730
  %v795 = vxor.u32 %v667, %v731
  %v796 = vxor.u32 %v668, %v732
  %v797 = vxor.u32 %v669, %v733
  %v798 = vxor.u32 %v670, %v734
  %v799 = vxor.u32 %v671, %v735
  %v800 = vxor.u32 %v672, %v736
  %v801 = vxor.u32 %v673, %v737
  %v802 = vxor.u32 %v674, %v738
  %v803 = vxor.u32 %v675, %v739
  %v804 = vxor.u32 %v676, %v740
  %v805 = vxor.u32 %v677, %v741
  %v806 = vxor.u32 %v678, %v742
  %v807 = vxor.u32 %v679, %v743
  %v808 = vxor.u32 %v680, %v744
  %v809 = vxor.u32 %v681, %v745
  %v810 = vxor.u32 %v682, %v746
  %v811 = vxor.u32 %v683, %v747
  %v812 = vxor.u32 %v684, %v748
  %v813 = vxor.u32 %v685, %v749
  %v814 = vxor.u32 %v686, %v750
  %v815 = vxor.u32 %v687, %v751
  %v816 = vxor.u32 %v688, %v752
  %v817 = vxor.u32 %v689, %v753
  %v818 = vxor.u32 %v690, %v754
  %v819 = vxor.u32 %v691, %v755
  %v820 = vxor.u32 %v692, %v756
  %v821 = vxor.u32 %v693, %v757
  %v822 = vxor.u32 %v694, %v758
  %v823 = vxor.u32 %v695, %v759
  %v824 = vxor.u32 %v696, %v760
  %v825 = vxor.u32 %v697, %v761
  %v826 = vxor.u32 %v698, %v762
  %v827 = vxor.u32 %v699, %v763
  %v828 = vxor.u32 %v700, %v764
  %v829 = vxor.u32 %v701, %v765
  %v830 = vxor.u32 %v702, %v766
  %v831 = vxor.u32 %v703, %v767
  %v832 = vxor.u32 %v704, %v768
  %v833 = vxor.u32 %v705, %v769
  %v834 = vxor.u32 %v706, %v770
  %v835 = vxor.u32 %v707, %v771
  %v836 = vxor.u32 %v708, %v772
  %v837 = vxor.u32 %v709, %v773
  %v838 = vxor.u32 %v710, %v774
  %v839 = vxor.u32 %v711, %v775
  %v840 = vxor.u32 %v712, %v776
  %v841 = vxor.u32 %v713, %v777
  %v842 = vxor.u32 %v714, %v778
  %v843 = vxor.u32 %v715, %v779
  %v844 = vxor.u32 %v716, %v780
  %v845 = vxor.u32 %v717, %v781
  %v846 = vxor.u32 %v718, %v782
  %v847 = vxor.u32 %v719, %v783
  %v848 = vxor.u32 %v720, %v784
  %v849 = vxor.u32 %v721, %v785
  %v850 = vxor.u32 %v722, %v786
  %vm851 = vcmp.ge.s32.totalorder %v787, 0
  %vm852 = vcmp.ge.s32.totalorder %v788, 0
  %vm853 = vcmp.ge.s32.totalorder %v789, 0
  %vm854 = vcmp.ge.s32.totalorder %v790, 0
  %vm855 = vcmp.ge.s32.totalorder %v791, 0
  %vm856 = vcmp.ge.s32.totalorder %v792, 0
  %vm857 = vcmp.ge.s32.totalorder %v793, 0
  %vm858 = vcmp.ge.s32.totalorder %v794, 0
  %vm859 = vcmp.ge.s32.totalorder %v795, 0
  %vm860 = vcmp.ge.s32.totalorder %v796, 0
  %vm861 = vcmp.ge.s32.totalorder %v797, 0
  %vm862 = vcmp.ge.s32.totalorder %v798, 0
  %vm863 = vcmp.ge.s32.totalorder %v799, 0
  %vm864 = vcmp.ge.s32.totalorder %v800, 0
  %vm865 = vcmp.ge.s32.totalorder %v801, 0
  %vm866 = vcmp.ge.s32.totalorder %v802, 0
  %vm867 = vcmp.ge.s32.totalorder %v803, 0
  %vm868 = vcmp.ge.s32.totalorder %v804, 0
  %vm869 = vcmp.ge.s32.totalorder %v805, 0
  %vm870 = vcmp.ge.s32.totalorder %v806, 0
  %vm871 = vcmp.ge.s32.totalorder %v807, 0
  %vm872 = vcmp.ge.s32.totalorder %v808, 0
  %vm873 = vcmp.ge.s32.totalorder %v809, 0
  %vm874 = vcmp.ge.s32.totalorder %v810, 0
  %vm875 = vcmp.ge.s32.totalorder %v811, 0
  %vm876 = vcmp.ge.s32.totalorder %v812, 0
  %vm877 = vcmp.ge.s32.totalorder %v813, 0
  %vm878 = vcmp.ge.s32.totalorder %v814, 0
  %vm879 = vcmp.ge.s32.totalorder %v815, 0
  %vm880 = vcmp.ge.s32.totalorder %v816, 0
  %vm881 = vcmp.ge.s32.totalorder %v817, 0
  %vm882 = vcmp.ge.s32.totalorder %v818, 0
  %vm883 = vcmp.ge.s32.totalorder %v819, 0
  %vm884 = vcmp.ge.s32.totalorder %v820, 0
  %vm885 = vcmp.ge.s32.totalorder %v821, 0
  %vm886 = vcmp.ge.s32.totalorder %v822, 0
  %vm887 = vcmp.ge.s32.totalorder %v823, 0
  %vm888 = vcmp.ge.s32.totalorder %v824, 0
  %vm889 = vcmp.ge.s32.totalorder %v825, 0
  %vm890 = vcmp.ge.s32.totalorder %v826, 0
  %vm891 = vcmp.ge.s32.totalorder %v827, 0
  %vm892 = vcmp.ge.s32.totalorder %v828, 0
  %vm893 = vcmp.ge.s32.totalorder %v829, 0
  %vm894 = vcmp.ge.s32.totalorder %v830, 0
  %vm895 = vcmp.ge.s32.totalorder %v831, 0
  %vm896 = vcmp.ge.s32.totalorder %v832, 0
  %vm897 = vcmp.ge.s32.totalorder %v833, 0
  %vm898 = vcmp.ge.s32.totalorder %v834, 0
  %vm899 = vcmp.ge.s32.totalorder %v835, 0
  %vm900 = vcmp.ge.s32.totalorder %v836, 0
  %vm901 = vcmp.ge.s32.totalorder %v837, 0
  %vm902 = vcmp.ge.s32.totalorder %v838, 0
  %vm903 = vcmp.ge.s32.totalorder %v839, 0
  %vm904 = vcmp.ge.s32.totalorder %v840, 0
  %vm905 = vcmp.ge.s32.totalorder %v841, 0
  %vm906 = vcmp.ge.s32.totalorder %v842, 0
  %vm907 = vcmp.ge.s32.totalorder %v843, 0
  %vm908 = vcmp.ge.s32.totalorder %v844, 0
  %vm909 = vcmp.ge.s32.totalorder %v845, 0
  %vm910 = vcmp.ge.s32.totalorder %v846, 0
  %vm911 = vcmp.ge.s32.totalorder %v847, 0
  %vm912 = vcmp.ge.s32.totalorder %v848, 0
  %vm913 = vcmp.ge.s32.totalorder %v849, 0
  %vm914 = vcmp.ge.s32.totalorder %v850, 0
  %vm915 = vmpackc.low %vm852, %vm851
  %vm916 = vmpackc.low %vm854, %vm853
  %vm917 = vmpackc.even %vm916, %vm915
  %vm918 = vmpackc.low %vm856, %vm855
  %vm919 = vmpackc.low %vm858, %vm857
  %vm920 = vmpackc.even %vm919, %vm918
  %vm921 = vmpackc.low %vm860, %vm859
  %vm922 = vmpackc.low %vm862, %vm861
  %vm923 = vmpackc.even %vm922, %vm921
  %vm924 = vmpackc.low %vm864, %vm863
  %vm925 = vmpackc.low %vm866, %vm865
  %vm926 = vmpackc.even %vm925, %vm924
  %vm927 = vmpackc.low %vm868, %vm867
  %vm928 = vmpackc.low %vm870, %vm869
  %vm929 = vmpackc.even %vm928, %vm927
  %vm930 = vmpackc.low %vm872, %vm871
  %vm931 = vmpackc.low %vm874, %vm873
  %vm932 = vmpackc.even %vm931, %vm930
  %vm933 = vmpackc.low %vm876, %vm875
  %vm934 = vmpackc.low %vm878, %vm877
  %vm935 = vmpackc.even %vm934, %vm933
  %vm936 = vmpackc.low %vm880, %vm879
  %vm937 = vmpackc.low %vm882, %vm881
  %vm938 = vmpackc.even %vm937, %vm936
  %vm939 = vmpackc.low %vm884, %vm883
  %vm940 = vmpackc.low %vm886, %vm885
  %vm941 = vmpackc.even %vm940, %vm939
  %vm942 = vmpackc.low %vm888, %vm887
  %vm943 = vmpackc.low %vm890, %vm889
  %vm944 = vmpackc.even %vm943, %vm942
  %vm945 = vmpackc.low %vm892, %vm891
  %vm946 = vmpackc.low %vm894, %vm893
  %vm947 = vmpackc.even %vm946, %vm945
  %vm948 = vmpackc.low %vm896, %vm895
  %vm949 = vmpackc.low %vm898, %vm897
  %vm950 = vmpackc.even %vm949, %vm948
  %vm951 = vmpackc.low %vm900, %vm899
  %vm952 = vmpackc.low %vm902, %vm901
  %vm953 = vmpackc.even %vm952, %vm951
  %vm954 = vmpackc.low %vm904, %vm903
  %vm955 = vmpackc.low %vm906, %vm905
  %vm956 = vmpackc.even %vm955, %vm954
  %vm957 = vmpackc.low %vm908, %vm907
  %vm958 = vmpackc.low %vm910, %vm909
  %vm959 = vmpackc.even %vm958, %vm957
  %vm960 = vmpackc.low %vm912, %vm911
  %vm961 = vmpackc.low %vm914, %vm913
  %vm962 = vmpackc.even %vm961, %vm960
  %v963 = vsel %vm917, 16843009, 0
  %v964 = vsel %vm920, 16843009, 0
  %v965 = vsel %vm923, 16843009, 0
  %v966 = vsel %vm926, 16843009, 0
  %v967 = vsel %vm929, 16843009, 0
  %v968 = vsel %vm932, 16843009, 0
  %v969 = vsel %vm935, 16843009, 0
  %v970 = vsel %vm938, 16843009, 0
  %v971 = vsel %vm941, 16843009, 0
  %v972 = vsel %vm944, 16843009, 0
  %v973 = vsel %vm947, 16843009, 0
  %v974 = vsel %vm950, 16843009, 0
  %v975 = vsel %vm953, 16843009, 0
  %v976 = vsel %vm956, 16843009, 0
  %v977 = vsel %vm959, 16843009, 0
  %v978 = vsel %vm962, 16843009, 0
  %v979 = vunpack.c.0.s8 %v963
  %v980 = vunpack.c.1.s8 %v963
  %v981 = vunpack.c.2.s8 %v963
  %v982 = vunpack.c.3.s8 %v963
  %v983 = vunpack.c.0.s8 %v964
  %v984 = vunpack.c.1.s8 %v964
  %v985 = vunpack.c.2.s8 %v964
  %v986 = vunpack.c.3.s8 %v964
  %v987 = vunpack.c.0.s8 %v965
  %v988 = vunpack.c.1.s8 %v965
  %v989 = vunpack.c.2.s8 %v965
  %v990 = vunpack.c.3.s8 %v965
  %v991 = vunpack.c.0.s8 %v966
  %v992 = vunpack.c.1.s8 %v966
  %v993 = vunpack.c.2.s8 %v966
  %v994 = vunpack.c.3.s8 %v966
  %v995 = vunpack.c.0.s8 %v967
  %v996 = vunpack.c.1.s8 %v967
  %v997 = vunpack.c.2.s8 %v967
  %v998 = vunpack.c.3.s8 %v967
  %v999 = vunpack.c.0.s8 %v968
  %v1000 = vunpack.c.1.s8 %v968
  %v1001 = vunpack.c.2.s8 %v968
  %v1002 = vunpack.c.3.s8 %v968
  %v1003 = vunpack.c.0.s8 %v969
  %v1004 = vunpack.c.1.s8 %v969
  %v1005 = vunpack.c.2.s8 %v969
  %v1006 = vunpack.c.3.s8 %v969
  %v1007 = vunpack.c.0.s8 %v970
  %v1008 = vunpack.c.1.s8 %v970
  %v1009 = vunpack.c.2.s8 %v970
  %v1010 = vunpack.c.3.s8 %v970
  %v1011 = vunpack.c.0.s8 %v971
  %v1012 = vunpack.c.1.s8 %v971
  %v1013 = vunpack.c.2.s8 %v971
  %v1014 = vunpack.c.3.s8 %v971
  %v1015 = vunpack.c.0.s8 %v972
  %v1016 = vunpack.c.1.s8 %v972
  %v1017 = vunpack.c.2.s8 %v972
  %v1018 = vunpack.c.3.s8 %v972
  %v1019 = vunpack.c.0.s8 %v973
  %v1020 = vunpack.c.1.s8 %v973
  %v1021 = vunpack.c.2.s8 %v973
  %v1022 = vunpack.c.3.s8 %v973
  %v1023 = vunpack.c.0.s8 %v974
  %v1024 = vunpack.c.1.s8 %v974
  %v1025 = vunpack.c.2.s8 %v974
  %v1026 = vunpack.c.3.s8 %v974
  %v1027 = vunpack.c.0.s8 %v975
  %v1028 = vunpack.c.1.s8 %v975
  %v1029 = vunpack.c.2.s8 %v975
  %v1030 = vunpack.c.3.s8 %v975
  %v1031 = vunpack.c.0.s8 %v976
  %v1032 = vunpack.c.1.s8 %v976
  %v1033 = vunpack.c.2.s8 %v976
  %v1034 = vunpack.c.3.s8 %v976
  %v1035 = vunpack.c.0.s8 %v977
  %v1036 = vunpack.c.1.s8 %v977
  %v1037 = vunpack.c.2.s8 %v977
  %v1038 = vunpack.c.3.s8 %v977
  %v1039 = vunpack.c.0.s8 %v978
  %v1040 = vunpack.c.1.s8 %v978
  %v1041 = vunpack.c.2.s8 %v978
  %v1042 = vunpack.c.3.s8 %v978
  %v1043 = vpack.c.b16 %v979, %v979
  %v1044 = vpack.c.b8 %v1043, %v1043
  %v1045 = vpack.c.b16 %v980, %v980
  %v1046 = vpack.c.b8 %v1045, %v1045
  %v1047 = vpack.c.b16 %v981, %v981
  %v1048 = vpack.c.b8 %v1047, %v1047
  %v1049 = vpack.c.b16 %v982, %v982
  %v1050 = vpack.c.b8 %v1049, %v1049
  %v1051 = vpack.c.b16 %v983, %v983
  %v1052 = vpack.c.b8 %v1051, %v1051
  %v1053 = vpack.c.b16 %v984, %v984
  %v1054 = vpack.c.b8 %v1053, %v1053
  %v1055 = vpack.c.b16 %v985, %v985
  %v1056 = vpack.c.b8 %v1055, %v1055
  %v1057 = vpack.c.b16 %v986, %v986
  %v1058 = vpack.c.b8 %v1057, %v1057
  %v1059 = vpack.c.b16 %v987, %v987
  %v1060 = vpack.c.b8 %v1059, %v1059
  %v1061 = vpack.c.b16 %v988, %v988
  %v1062 = vpack.c.b8 %v1061, %v1061
  %v1063 = vpack.c.b16 %v989, %v989
  %v1064 = vpack.c.b8 %v1063, %v1063
  %v1065 = vpack.c.b16 %v990, %v990
  %v1066 = vpack.c.b8 %v1065, %v1065
  %v1067 = vpack.c.b16 %v991, %v991
  %v1068 = vpack.c.b8 %v1067, %v1067
  %v1069 = vpack.c.b16 %v992, %v992
  %v1070 = vpack.c.b8 %v1069, %v1069
  %v1071 = vpack.c.b16 %v993, %v993
  %v1072 = vpack.c.b8 %v1071, %v1071
  %v1073 = vpack.c.b16 %v994, %v994
  %v1074 = vpack.c.b8 %v1073, %v1073
  %v1075 = vpack.c.b16 %v995, %v995
  %v1076 = vpack.c.b8 %v1075, %v1075
  %v1077 = vpack.c.b16 %v996, %v996
  %v1078 = vpack.c.b8 %v1077, %v1077
  %v1079 = vpack.c.b16 %v997, %v997
  %v1080 = vpack.c.b8 %v1079, %v1079
  %v1081 = vpack.c.b16 %v998, %v998
  %v1082 = vpack.c.b8 %v1081, %v1081
  %v1083 = vpack.c.b16 %v999, %v999
  %v1084 = vpack.c.b8 %v1083, %v1083
  %v1085 = vpack.c.b16 %v1000, %v1000
  %v1086 = vpack.c.b8 %v1085, %v1085
  %v1087 = vpack.c.b16 %v1001, %v1001
  %v1088 = vpack.c.b8 %v1087, %v1087
  %v1089 = vpack.c.b16 %v1002, %v1002
  %v1090 = vpack.c.b8 %v1089, %v1089
  %v1091 = vpack.c.b16 %v1003, %v1003
  %v1092 = vpack.c.b8 %v1091, %v1091
  %v1093 = vpack.c.b16 %v1004, %v1004
  %v1094 = vpack.c.b8 %v1093, %v1093
  %v1095 = vpack.c.b16 %v1005, %v1005
  %v1096 = vpack.c.b8 %v1095, %v1095
  %v1097 = vpack.c.b16 %v1006, %v1006
  %v1098 = vpack.c.b8 %v1097, %v1097
  %v1099 = vpack.c.b16 %v1007, %v1007
  %v1100 = vpack.c.b8 %v1099, %v1099
  %v1101 = vpack.c.b16 %v1008, %v1008
  %v1102 = vpack.c.b8 %v1101, %v1101
  %v1103 = vpack.c.b16 %v1009, %v1009
  %v1104 = vpack.c.b8 %v1103, %v1103
  %v1105 = vpack.c.b16 %v1010, %v1010
  %v1106 = vpack.c.b8 %v1105, %v1105
  %v1107 = vpack.c.b16 %v1011, %v1011
  %v1108 = vpack.c.b8 %v1107, %v1107
  %v1109 = vpack.c.b16 %v1012, %v1012
  %v1110 = vpack.c.b8 %v1109, %v1109
  %v1111 = vpack.c.b16 %v1013, %v1013
  %v1112 = vpack.c.b8 %v1111, %v1111
  %v1113 = vpack.c.b16 %v1014, %v1014
  %v1114 = vpack.c.b8 %v1113, %v1113
  %v1115 = vpack.c.b16 %v1015, %v1015
  %v1116 = vpack.c.b8 %v1115, %v1115
  %v1117 = vpack.c.b16 %v1016, %v1016
  %v1118 = vpack.c.b8 %v1117, %v1117
  %v1119 = vpack.c.b16 %v1017, %v1017
  %v1120 = vpack.c.b8 %v1119, %v1119
  %v1121 = vpack.c.b16 %v1018, %v1018
  %v1122 = vpack.c.b8 %v1121, %v1121
  %v1123 = vpack.c.b16 %v1019, %v1019
  %v1124 = vpack.c.b8 %v1123, %v1123
  %v1125 = vpack.c.b16 %v1020, %v1020
  %v1126 = vpack.c.b8 %v1125, %v1125
  %v1127 = vpack.c.b16 %v1021, %v1021
  %v1128 = vpack.c.b8 %v1127, %v1127
  %v1129 = vpack.c.b16 %v1022, %v1022
  %v1130 = vpack.c.b8 %v1129, %v1129
  %v1131 = vpack.c.b16 %v1023, %v1023
  %v1132 = vpack.c.b8 %v1131, %v1131
  %v1133 = vpack.c.b16 %v1024, %v1024
  %v1134 = vpack.c.b8 %v1133, %v1133
  %v1135 = vpack.c.b16 %v1025, %v1025
  %v1136 = vpack.c.b8 %v1135, %v1135
  %v1137 = vpack.c.b16 %v1026, %v1026
  %v1138 = vpack.c.b8 %v1137, %v1137
  %v1139 = vpack.c.b16 %v1027, %v1027
  %v1140 = vpack.c.b8 %v1139, %v1139
  %v1141 = vpack.c.b16 %v1028, %v1028
  %v1142 = vpack.c.b8 %v1141, %v1141
  %v1143 = vpack.c.b16 %v1029, %v1029
  %v1144 = vpack.c.b8 %v1143, %v1143
  %v1145 = vpack.c.b16 %v1030, %v1030
  %v1146 = vpack.c.b8 %v1145, %v1145
  %v1147 = vpack.c.b16 %v1031, %v1031
  %v1148 = vpack.c.b8 %v1147, %v1147
  %v1149 = vpack.c.b16 %v1032, %v1032
  %v1150 = vpack.c.b8 %v1149, %v1149
  %v1151 = vpack.c.b16 %v1033, %v1033
  %v1152 = vpack.c.b8 %v1151, %v1151
  %v1153 = vpack.c.b16 %v1034, %v1034
  %v1154 = vpack.c.b8 %v1153, %v1153
  %v1155 = vpack.c.b16 %v1035, %v1035
  %v1156 = vpack.c.b8 %v1155, %v1155
  %v1157 = vpack.c.b16 %v1036, %v1036
  %v1158 = vpack.c.b8 %v1157, %v1157
  %v1159 = vpack.c.b16 %v1037, %v1037
  %v1160 = vpack.c.b8 %v1159, %v1159
  %v1161 = vpack.c.b16 %v1038, %v1038
  %v1162 = vpack.c.b8 %v1161, %v1161
  %v1163 = vpack.c.b16 %v1039, %v1039
  %v1164 = vpack.c.b8 %v1163, %v1163
  %v1165 = vpack.c.b16 %v1040, %v1040
  %v1166 = vpack.c.b8 %v1165, %v1165
  %v1167 = vpack.c.b16 %v1041, %v1041
  %v1168 = vpack.c.b8 %v1167, %v1167
  %v1169 = vpack.c.b16 %v1042, %v1042
  %v1170 = vpack.c.b8 %v1169, %v1169
  %1171 = vst [vmem:[%s1] sm:$0x3] %v1044
  %1172 = vst [vmem:[%s1 + $0x2] sm:$0x3] %v1046
  %1173 = vst [vmem:[%s1 + $0x4] sm:$0x3] %v1048
  %1174 = vst [vmem:[%s1 + $0x6] sm:$0x3] %v1050
  %1175 = vst [vmem:[%s1 + $0x8] sm:$0x3] %v1052
  %1176 = vst [vmem:[%s1 + $0xa] sm:$0x3] %v1054
  %1177 = vst [vmem:[%s1 + $0xc] sm:$0x3] %v1056
  %1178 = vst [vmem:[%s1 + $0xe] sm:$0x3] %v1058
  %1179 = vst [vmem:[%s1 + $0x10] sm:$0x3] %v1060
  %1180 = vst [vmem:[%s1 + $0x12] sm:$0x3] %v1062
  %1181 = vst [vmem:[%s1 + $0x14] sm:$0x3] %v1064
  %1182 = vst [vmem:[%s1 + $0x16] sm:$0x3] %v1066
  %1183 = vst [vmem:[%s1 + $0x18] sm:$0x3] %v1068
  %1184 = vst [vmem:[%s1 + $0x1a] sm:$0x3] %v1070
  %1185 = vst [vmem:[%s1 + $0x1c] sm:$0x3] %v1072
  %1186 = vst [vmem:[%s1 + $0x1e] sm:$0x3] %v1074
  %1187 = vst [vmem:[%s1 + $0x20] sm:$0x3] %v1076
  %1188 = vst [vmem:[%s1 + $0x22] sm:$0x3] %v1078
  %1189 = vst [vmem:[%s1 + $0x24] sm:$0x3] %v1080
  %1190 = vst [vmem:[%s1 + $0x26] sm:$0x3] %v1082
  %1191 = vst [vmem:[%s1 + $0x28] sm:$0x3] %v1084
  %1192 = vst [vmem:[%s1 + $0x2a] sm:$0x3] %v1086
  %1193 = vst [vmem:[%s1 + $0x2c] sm:$0x3] %v1088
  %1194 = vst [vmem:[%s1 + $0x2e] sm:$0x3] %v1090
  %1195 = vst [vmem:[%s1 + $0x30] sm:$0x3] %v1092
  %1196 = vst [vmem:[%s1 + $0x32] sm:$0x3] %v1094
  %1197 = vst [vmem:[%s1 + $0x34] sm:$0x3] %v1096
  %1198 = vst [vmem:[%s1 + $0x36] sm:$0x3] %v1098
  %1199 = vst [vmem:[%s1 + $0x38] sm:$0x3] %v1100
  %1200 = vst [vmem:[%s1 + $0x3a] sm:$0x3] %v1102
  %1201 = vst [vmem:[%s1 + $0x3c] sm:$0x3] %v1104
  %1202 = vst [vmem:[%s1 + $0x3e] sm:$0x3] %v1106
  %1203 = vst [vmem:[%s1 + $0x40] sm:$0x3] %v1108
  %1204 = vst [vmem:[%s1 + $0x42] sm:$0x3] %v1110
  %1205 = vst [vmem:[%s1 + $0x44] sm:$0x3] %v1112
  %1206 = vst [vmem:[%s1 + $0x46] sm:$0x3] %v1114
  %1207 = vst [vmem:[%s1 + $0x48] sm:$0x3] %v1116
  %1208 = vst [vmem:[%s1 + $0x4a] sm:$0x3] %v1118
  %1209 = vst [vmem:[%s1 + $0x4c] sm:$0x3] %v1120
  %1210 = vst [vmem:[%s1 + $0x4e] sm:$0x3] %v1122
  %1211 = vst [vmem:[%s1 + $0x50] sm:$0x3] %v1124
  %1212 = vst [vmem:[%s1 + $0x52] sm:$0x3] %v1126
  %1213 = vst [vmem:[%s1 + $0x54] sm:$0x3] %v1128
  %1214 = vst [vmem:[%s1 + $0x56] sm:$0x3] %v1130
  %1215 = vst [vmem:[%s1 + $0x58] sm:$0x3] %v1132
  %1216 = vst [vmem:[%s1 + $0x5a] sm:$0x3] %v1134
  %1217 = vst [vmem:[%s1 + $0x5c] sm:$0x3] %v1136
  %1218 = vst [vmem:[%s1 + $0x5e] sm:$0x3] %v1138
  %1219 = vst [vmem:[%s1 + $0x60] sm:$0x3] %v1140
  %1220 = vst [vmem:[%s1 + $0x62] sm:$0x3] %v1142
  %1221 = vst [vmem:[%s1 + $0x64] sm:$0x3] %v1144
  %1222 = vst [vmem:[%s1 + $0x66] sm:$0x3] %v1146
  %1223 = vst [vmem:[%s1 + $0x68] sm:$0x3] %v1148
  %1224 = vst [vmem:[%s1 + $0x6a] sm:$0x3] %v1150
  %1225 = vst [vmem:[%s1 + $0x6c] sm:$0x3] %v1152
  %1226 = vst [vmem:[%s1 + $0x6e] sm:$0x3] %v1154
  %1227 = vst [vmem:[%s1 + $0x70] sm:$0x3] %v1156
  %1228 = vst [vmem:[%s1 + $0x72] sm:$0x3] %v1158
  %1229 = vst [vmem:[%s1 + $0x74] sm:$0x3] %v1160
  %1230 = vst [vmem:[%s1 + $0x76] sm:$0x3] %v1162
  %1231 = vst [vmem:[%s1 + $0x78] sm:$0x3] %v1164
  %1232 = vst [vmem:[%s1 + $0x7a] sm:$0x3] %v1166
  %1233 = vst [vmem:[%s1 + $0x7c] sm:$0x3] %v1168
  %1234 = vst [vmem:[%s1 + $0x7e] sm:$0x3] %v1170
  // Predicated region
  $region6: #{_sparse_dropout_device.1} parent=0 // pred_check
    _
  $region7: #{_sparse_dropout_device.1} parent=0 // pred_check_branch
    %1236 = sbr.rel (0) target = $region9
  $region8: #{_sparse_dropout_device.1} parent=0 // pred_region
    _
  $region9: #{_sparse_dropout_device.1} parent=0 // pred_fallthru
    _
  // Predicated region
  $region10: #{_sparse_dropout_device.1} parent=0 // pred_check
    _
  $region11: #{_sparse_dropout_device.1} parent=0 // pred_check_branch
    %1238 = sbr.rel (0) target = $region13
  $region12: #{_sparse_dropout_device.1} parent=0 // pred_region
    _
  $region13: #{_sparse_dropout_device.1} parent=0 // pred_fallthru
    _

</llo_original>
